<compile_context>
chip_gen: v6e
topology: v6e:2x2x1
jax: 0.10.0
libtpu: 0.0.40
codegen_flags: <defaults>
</compile_context>

<pallas_src>
import jax
import jax.numpy as jnp
from jax.experimental import pallas as pl
from jax.experimental.pallas import tpu as pltpu


_TILE_BYTE_BUDGET = 4 * 1024 * 1024  # ~4 MiB per tile (in + out double-buffered = 16 MiB)
_VMEM_LIMIT_BYTES = 32 * 1024 * 1024  # safe on v5e/v6e (128 MiB phys) and v7x (64 MiB phys)


def _round_up(a: int, b: int) -> int:
    return -(-a // b) * b


def _sublane_multiple(itemsize: int) -> int:
    # 8 for 4-byte, 16 for 2-byte, 32 for 1-byte dtypes (packing granularity).
    return max(8, 32 // max(1, itemsize))


def _pick_row_tiling(rows: int, itemsize: int, batch: int):
    """Tile the per-sample row axis of the (B, rows, 128) view."""
    sub = _sublane_multiple(itemsize)
    max_rows = max(sub, (_TILE_BYTE_BUDGET // (128 * itemsize)) // sub * sub)
    n_tiles = max(1, -(-rows // max_rows))
    # Keep both v7x TensorCores busy: when a single sample carries all the
    # work, split its rows into an even number of tiles.
    if batch == 1 and n_tiles % 2 == 1 and rows > n_tiles * sub:
        n_tiles += 1
    # Even-ish split rounded to the sublane multiple -> balanced tiles and
    # (almost always) no masked partial trailing block.
    tile_rows = min(rows, _round_up(-(-rows // n_tiles), sub))
    n_tiles = -(-rows // tile_rows)
    return tile_rows, n_tiles


def _pick_col_tiling(M: int, itemsize: int, batch: int):
    """Tile the flattened per-sample axis of the ragged (B, M) view."""
    sub_rows = max(batch, 8)  # sublane footprint of one column tile
    max_cols = max(128, (_TILE_BYTE_BUDGET // (sub_rows * itemsize)) // 128 * 128)
    n_tiles = max(1, -(-M // max_cols))
    if n_tiles == 1 and M > 256:
        n_tiles = 2  # give the second v7x TensorCore some work
    if n_tiles == 1:
        return M, 1  # full-extent block: no 128-alignment requirement
    tile_cols = _round_up(-(-M // n_tiles), 128)
    n_tiles = -(-M // tile_cols)
    return tile_cols, n_tiles


def _drop_path_rows_kernel(scale_smem, x_ref, o_ref):
    # scale_smem: SMEM (B,) f32; x_ref/o_ref: VMEM (1, tile_rows, 128).
    b = pl.program_id(0)
    s = scale_smem[b]
    o_ref[...] = (x_ref[...].astype(jnp.float32) * s).astype(o_ref.dtype)


def _drop_path_cols_kernel(scale_ref, x_ref, o_ref):
    # scale_ref: VMEM (B, 1) f32; x_ref/o_ref: VMEM (B, tile_cols).
    s = scale_ref[...]
    o_ref[...] = (x_ref[...].astype(jnp.float32) * s).astype(o_ref.dtype)


def drop_path_pallas(x, drop_prob: float = 0.0, training: bool = False, *, key=None):
    """Pallas implementation of drop_path (per-sample stochastic depth)."""
    if drop_prob == 0.0 or not training:
        return x
    assert key is not None, "need a PRNG key when training with drop_prob > 0"
    # NOTE: drop_prob == 1.0 gives keep_prob == 0 and an inf/NaN scale; this
    # matches the PyTorch original's x.div(0) behavior.

    keep_prob = 1.0 - drop_prob
    B = int(x.shape[0])

    # random_tensor = floor(keep_prob + U[0,1)) -> Bernoulli(keep_prob) per sample.
    u = jax.random.uniform(key, (B,), dtype=jnp.float32)
    scale = (jnp.floor(keep_prob + u) / keep_prob).astype(jnp.float32)

    orig_shape = x.shape
    M = 1
    for d in orig_shape[1:]:
        M *= int(d)
    itemsize = jnp.dtype(x.dtype).itemsize

    cost = pl.CostEstimate(flops=B * M, transcendentals=0,
                           bytes_accessed=2 * B * M * itemsize)

    if M % 128 == 0 and M > 0:
        # Fast path: lane-dense (B, rows, 128) view, no padding.
        rows = M // 128
        tile_rows, n_row_tiles = _pick_row_tiling(rows, itemsize, B)
        xr = x.reshape(B, rows, 128)
        block = (1, tile_rows, 128)
        out = pl.pallas_call(
            _drop_path_rows_kernel,
            out_shape=jax.ShapeDtypeStruct(xr.shape, x.dtype),
            grid_spec=pltpu.PrefetchScalarGridSpec(
                num_scalar_prefetch=1,
                grid=(B, n_row_tiles),
                in_specs=[pl.BlockSpec(block, lambda b, m, s: (b, m, 0))],
                out_specs=pl.BlockSpec(block, lambda b, m, s: (b, m, 0)),
            ),
            input_output_aliases={1: 0},  # alias x's HBM buffer (index counts the prefetch arg)
            cost_estimate=cost,
            compiler_params=pltpu.CompilerParams(
                dimension_semantics=("parallel", "parallel"),
                vmem_limit_bytes=_VMEM_LIMIT_BYTES,
            ),
        )(scale, xr)
        return out.reshape(orig_shape)

    # Ragged path (M % 128 != 0): 2-D (B, M) view tiled along lanes; the
    # partial trailing block is masked in-kernel -- no pad/slice HBM passes.
    xr = x.reshape(B, M)
    scale_col = scale.reshape(B, 1)
    tile_cols, n_col_tiles = _pick_col_tiling(M, itemsize, B)
    out = pl.pallas_call(
        _drop_path_cols_kernel,
        out_shape=jax.ShapeDtypeStruct((B, M), x.dtype),
        grid=(n_col_tiles,),
        in_specs=[pl.BlockSpec((B, 1), lambda m: (0, 0)),
                  pl.BlockSpec((B, tile_cols), lambda m: (0, m))],
        out_specs=pl.BlockSpec((B, tile_cols), lambda m: (0, m)),
        input_output_aliases={1: 0},
        cost_estimate=cost,
        compiler_params=pltpu.CompilerParams(
            dimension_semantics=("parallel",),
            vmem_limit_bytes=_VMEM_LIMIT_BYTES,
        ),
    )(scale_col, xr)
    return out.reshape(orig_shape)


def drop_path_ref(x, drop_prob, training, key):
    """Pure-JAX reference mirroring the PyTorch semantics."""
    if drop_prob == 0.0 or not training:
        return x
    keep_prob = 1.0 - drop_prob
    B = x.shape[0]
    u = jax.random.uniform(key, (B,), dtype=jnp.float32)
    mask = jnp.floor(keep_prob + u).reshape((B,) + (1,) * (x.ndim - 1))
    return (x / keep_prob) * mask.astype(x.dtype)


if __name__ == "__main__":
    root = jax.random.PRNGKey(0)
    k_x, k_mask, k_x2, k_x3 = jax.random.split(root, 4)
    drop_prob = 0.5

    # Case 1: standard NCHW activation, M = C*H*W = 1024 (lane-dense fast path).
    x = jax.random.normal(k_x, (2, 4, 16, 16), dtype=jnp.float32)
    y = jax.block_until_ready(drop_path_pallas(x, drop_prob, True, key=k_mask))
    y_ref = drop_path_ref(x, drop_prob, True, k_mask)
    assert jnp.allclose(y, y_ref, atol=1e-6, rtol=1e-6), "aligned f32 mismatch"

    # Case 2: ragged per-sample size (M = 300) -> masked-tail 2-D path, no pad.
    x2 = jax.random.normal(k_x2, (2, 3, 10, 10), dtype=jnp.float32)
    y2 = jax.block_until_ready(drop_path_pallas(x2, drop_prob, True, key=k_mask))
    y2_ref = drop_path_ref(x2, drop_prob, True, k_mask)
    assert jnp.allclose(y2, y2_ref, atol=1e-6, rtol=1e-6), "ragged mismatch"

    # Case 3: batch of one -> row axis split so both v7x TensorCores get work.
    x3 = jax.random.normal(k_x3, (1, 8, 16, 16), dtype=jnp.float32)
    y3 = jax.block_until_ready(drop_path_pallas(x3, drop_prob, True, key=k_mask))
    y3_ref = drop_path_ref(x3, drop_prob, True, k_mask)
    assert jnp.allclose(y3, y3_ref, atol=1e-6, rtol=1e-6), "B=1 mismatch"

    # Case 4: bf16 input (dtype-aware tiling; multiply runs in f32).
    xb = x.astype(jnp.bfloat16)
    yb = jax.block_until_ready(drop_path_pallas(xb, drop_prob, True, key=k_mask))
    yb_ref = drop_path_ref(xb, drop_prob, True, k_mask)
    assert jnp.allclose(yb.astype(jnp.float32), yb_ref.astype(jnp.float32),
                        atol=5e-2, rtol=5e-2), "bf16 mismatch"

    # Case 5: eval / not-training path is identity.
    y_eval = jax.block_until_ready(drop_path_pallas(x, drop_prob, False, key=k_mask))
    assert jnp.allclose(y_eval, x), "eval-path (identity) mismatch"

    print("KERNEL_OK")
</pallas_src>

<mosaic_0001>
module attributes {stable_mosaic.version = 11 : i64} {
  func.func @_drop_path_rows_kernel(%arg0: i32, %arg1: i32, %arg2: memref<2xf32, #tpu.memory_space<smem>>, %arg3: memref<1x8x128xf32, #tpu.memory_space<vmem>>, %arg4: memref<1x8x128xf32, #tpu.memory_space<vmem>>) attributes {dimension_semantics = [#tpu.dimension_semantics<parallel>, #tpu.dimension_semantics<parallel>], iteration_bounds = array<i64: 2, 1>, scalar_prefetch = 1 : i64, scratch_operands = 0 : i64, tpu.core_type = #tpu.core_type<tc>, window_params = [{transform_indices = @transform_0, window_bounds = array<i64: 1, 8, 128>}, {transform_indices = @transform_1, window_bounds = array<i64: 1, 8, 128>}]} {
    %0 = arith.index_cast %arg0 : i32 to index
    %1 = memref.load %arg2[%0] : memref<2xf32, #tpu.memory_space<smem>>
    %c0 = arith.constant 0 : index
    %c0_0 = arith.constant 0 : index
    %c0_1 = arith.constant 0 : index
    %2 = vector.load %arg3[%c0, %c0_0, %c0_1] : memref<1x8x128xf32, #tpu.memory_space<vmem>>, vector<1x8x128xf32>
    %3 = vector.broadcast %1 : f32 to vector<1x8x128xf32>
    %4 = arith.mulf %2, %3 : vector<1x8x128xf32>
    %c0_2 = arith.constant 0 : index
    %c0_3 = arith.constant 0 : index
    %c0_4 = arith.constant 0 : index
    %5 = vector.load %arg4[%c0_2, %c0_3, %c0_4] : memref<1x8x128xf32, #tpu.memory_space<vmem>>, vector<1x8x128xf32>
    tpu.vector_store %arg4[%c0_2, %c0_3, %c0_4], %4 {strides = array<i32>} : memref<1x8x128xf32, #tpu.memory_space<vmem>>, vector<1x8x128xf32>,
    return
  }
  func.func @transform_0(%arg0: i32, %arg1: i32, %arg2: memref<2xf32, #tpu.memory_space<smem>>) -> (i32, i32, i32) {
    %c0_i32 = arith.constant 0 : i32
    %c0_i32_0 = arith.constant 0 : i32
    return %arg0, %arg1, %c0_i32 : i32, i32, i32
  }
  func.func @transform_1(%arg0: i32, %arg1: i32, %arg2: memref<2xf32, #tpu.memory_space<smem>>) -> (i32, i32, i32) {
    %c0_i32 = arith.constant 0 : i32
    %c0_i32_0 = arith.constant 0 : i32
    return %arg0, %arg1, %c0_i32 : i32, i32, i32
  }
}

</mosaic_0001>

<llo_original>
// kernel: tpu_custom_call.1
$region0: #{tpu_custom_call.1}
  #allocation0 [shape = 'u32[]', space=smem, size = 0x4, offset = 0x4, fixed_abs, tag = 'smem constant byte address 0x4 - core index']
  #allocation1 [shape = 'u32[144,128]{1,0:T(1,128)}', space=vmem, size = 0x12000, scoped, tag = 'internal scratch']
  #allocation2 [shape = 's32[1]{0}', space=sflag, size = 0x4, scoped, tag = 'scoped memory for tpu_custom_call.1']
  #allocation3 [shape = 'u8[512]{0}', space=smem, size = 0x200, scoped, tag = 'prefetched SMEM operand 0']
  %s0 = inlined_call_operand.vmem [shape: f32[2], index: 0, kind: input, shape index: {}]
  %s1 = inlined_call_operand.hbm [shape: f32[2,8,128], index: 1, kind: input, shape index: {}, may-alias: {1,2}]
  %s2 = inlined_call_operand.hbm [shape: f32[2,8,128], index: 2, kind: output, shape index: {}, may-alias: {1,2}]
  %s3 = sld [smem:[#allocation0]]
  $region41: #{tpu_custom_call.1} parent=0
    _
  %s5 = ssub.s32 1, %s3
  %s6 = scalar_select 0, %s5, %s3
  %s7 = sshll.u32 %s0, 4
  %s8 = int_to_ptr.vmem [resolvable:$true] %s7
  %10 = dma.vmem_to_smem %s8, 16, [#allocation3], [#allocation2]
  %11 = dma.done [#allocation2], 16
  %12 = sfence
  $region1: #{tpu_custom_call.1} parent=0
    #allocation4 [shape = 'u8[8192]{0}', space=vmem, size = 0x2000, scoped, tag = 'input window, operand 1']
    #allocation5 [shape = 's32[2]{0}', space=sflag, size = 0x8, scoped, tag = 'scoped memory for tpu_custom_call.1']
    #allocation6 [shape = 's32[2]{0}', space=sflag, size = 0x8, scoped, tag = 'scoped memory for tpu_custom_call.1']
    #allocation7 [shape = 'u8[8192]{0}', space=vmem, size = 0x2000, scoped, tag = 'output window, operand 0']
    %13 = vsyncpa [#allocation5], 0
    %s14 = scalar_lea.sflag [#allocation5], 1
    %15 = vsyncpa %s14, 0
    %16 = vsyncpa [#allocation6], 0
    %s17 = scalar_lea.sflag [#allocation6], 1
    %18 = vsyncpa %s17, 0
    loop: start=0, step=1, limit=4
    $region2: #{tpu_custom_call.1} parent=1 // loop_pre_header
      _
    $region3: #{tpu_custom_call.1} parent=1 // loop_header
      %s20 = sphi 0, %s24
      %p21 = scmp.ge.s32.totalorder %s20, 4
      %s27 = sphi 0, %s39
      %s28 = sphi 0, %s35
      %s29 = sphi 0, %s27
      %s30 = sphi 0, %s28
      %s31 = sphi 0, %s29
      %s32 = sphi 0, %s30
      %s44 = sphi 0, %s46
      %s47 = sphi 0, %s44
      %s48 = sphi 0, %s47
      %s64 = sphi 0, %s48
      %s72 = sphi 0, %s74
      %s75 = sphi 0, %s72
      %s76 = sphi 0, %s75
      %s92 = sphi 0, %s76
    $region4: #{tpu_custom_call.1} parent=1 // loop_header_branch
      %23 = sbr.rel (%p21) target = $region8
    $region5: #{tpu_custom_call.1} parent=1 // loop_body
      %s25 = ssub.s32 %s20, 1
      %s26 = ssub.s32 %s20, 2
      %s33 = sadd.s32 1, %s28
      %p34 = scmp.ge.s32.totalorder %s33, 1
      %s35 = scalar_select %p34, 0, %s33
      %s36 = sadd.s32 1, %s27
      %s37 = scalar_select %p34, %s36, %s27
      %p38 = scmp.ge.s32.totalorder %s37, 2
      %s39 = scalar_select %p38, 0, %s37
      %s40 = ssub.s32 %s27, %s39
      %s41 = ssub.s32 %s28, %s35
      %s42 = sor.u32 %s40, %s41
      %p43 = scmp.eq.s32.totalorder %s42, 0
      %s45 = sadd.s32 %s44, 1
      %s46 = scalar_select %p43, %s44, %s45
      %p49 = pneg %p43
      %p50 = scmp.eq.s32.totalorder %s20, 1
      %p51 = por %p49, %p50
      %p52 = scmp.ne.s32.totalorder %s44, %s47
      %p53 = scmp.eq.s32.totalorder %s20, 0
      %p54 = por %p52, %p53
      %p55 = scmp.ne.s32.totalorder %s44, %s47
      %p56 = scmp.eq.s32.totalorder %s25, 1
      %p57 = por %p55, %p56
      %p58 = scmp.ne.s32.totalorder %s47, %s48
      %p59 = scmp.eq.s32.totalorder %s25, 0
      %p60 = por %p58, %p59
      %p61 = scmp.ne.s32.totalorder %s47, %s48
      %p62 = scmp.eq.s32.totalorder %s26, 1
      %p63 = por %p61, %p62
      %p65 = scmp.ne.s32.totalorder %s48, %s64
      %p66 = scmp.eq.s32.totalorder %s26, 0
      %p67 = por %p65, %p66
      %s68 = ssub.s32 %s27, %s39
      %s69 = ssub.s32 %s28, %s35
      %s70 = sor.u32 %s68, %s69
      %p71 = scmp.eq.s32.totalorder %s70, 0
      %s73 = sadd.s32 %s72, 1
      %s74 = scalar_select %p71, %s72, %s73
      %p77 = pneg %p71
      %p78 = scmp.eq.s32.totalorder %s20, 1
      %p79 = por %p77, %p78
      %p80 = scmp.ne.s32.totalorder %s72, %s75
      %p81 = scmp.eq.s32.totalorder %s20, 0
      %p82 = por %p80, %p81
      %p83 = scmp.ne.s32.totalorder %s72, %s75
      %p84 = scmp.eq.s32.totalorder %s25, 1
      %p85 = por %p83, %p84
      %p86 = scmp.ne.s32.totalorder %s75, %s76
      %p87 = scmp.eq.s32.totalorder %s25, 0
      %p88 = por %p86, %p87
      %p89 = scmp.ne.s32.totalorder %s75, %s76
      %p90 = scmp.eq.s32.totalorder %s26, 1
      %p91 = por %p89, %p90
      %p93 = scmp.ne.s32.totalorder %s76, %s92
      %p94 = scmp.eq.s32.totalorder %s26, 0
      %p95 = por %p93, %p94
      %p96 = scmp.le.s32.totalorder 1, %s20
      %p97 = scmp.lt.s32.totalorder %s20, 3
      %p98 = pnand %p96, %p97
      %p99 = pneg %p98
      // Predicated region
      $region9: #{tpu_custom_call.1} parent=5 // pred_check
        _
      $region10: #{tpu_custom_call.1} parent=5 // pred_check_branch
        %101 = sbr.rel (%p98) target = $region12
      $region11: #{tpu_custom_call.1} parent=5 // pred_region
        %s102 = ssub.s32 %s20, 1
      $region12: #{tpu_custom_call.1} parent=5 // pred_fallthru
        _
      %p103 = scmp.lt.s32.totalorder %s20, 2
      // Predicated region
      $region13: #{tpu_custom_call.1} parent=5 // pred_check
        %p104 = pneg %p103
      $region14: #{tpu_custom_call.1} parent=5 // pred_check_branch
        %106 = sbr.rel (%p104) target = $region16
      $region15: #{tpu_custom_call.1} parent=5 // pred_region
        // Predicated region
        $region17: #{tpu_custom_call.1} parent=15 // pred_check
          %p107 = pneg %p54
        $region18: #{tpu_custom_call.1} parent=15 // pred_check_branch
          %109 = sbr.rel (%p107) target = $region20
        $region19: #{tpu_custom_call.1} parent=15 // pred_region
          %s110 = sand.u32 %s44, 1
          %s111 = scalar_lea.sflag [#allocation5], %s110
          %s112 = sand.u32 %s44, 1
          %s113 = smul.addr %s112, 8
          %s114 = scalar_lea.vmem [#allocation4], %s113
          %s116 = ssub.s32 128, 128
          %117 = vsyncadd %s111, %s116
          %s118 = sadd.s32 %s28, %s27
          %s119 = smul.addr %s118, 128
          %s120 = scalar_lea.hbm %s1, %s119
          %s122 = sshll.u32 %s114, 4
          %s123 = int_to_ptr.vmem [resolvable:$true] %s122
          %125 = dma.hbm_to_vmem [thread:$0]  %s120, 128, %s123, %s111
        $region20: #{tpu_custom_call.1} parent=15 // pred_fallthru
          _
      $region16: #{tpu_custom_call.1} parent=5 // pred_fallthru
        _
      %p126 = scmp.le.s32.totalorder 1, %s20
      %p127 = scmp.lt.s32.totalorder %s20, 3
      %p128 = pnand %p126, %p127
      %p129 = pneg %p128
      // Predicated region
      $region21: #{tpu_custom_call.1} parent=5 // pred_check
        _
      $region22: #{tpu_custom_call.1} parent=5 // pred_check_branch
        %131 = sbr.rel (%p128) target = $region24
      $region23: #{tpu_custom_call.1} parent=5 // pred_region
        %s132 = ssub.s32 %s20, 1
        %s133 = sand.u32 %s47, 1
        %s134 = scalar_lea.sflag [#allocation5], %s133
        %s135 = sand.u32 %s47, 1
        %s136 = smul.addr %s135, 8
        %s137 = scalar_lea.vmem [#allocation4], %s136
        // Predicated region
        $region25: #{tpu_custom_call.1} parent=23 // pred_check
          %p138 = pneg %p60
        $region26: #{tpu_custom_call.1} parent=23 // pred_check_branch
          %140 = sbr.rel (%p138) target = $region28
        $region27: #{tpu_custom_call.1} parent=23 // pred_region
          %141 = dma.done %s134, 128
        $region28: #{tpu_custom_call.1} parent=23 // pred_fallthru
          _
        %s142 = sand.u32 %s47, 1
        %s143 = scalar_lea.sflag [#allocation5], %s142
        %s144 = sand.u32 %s47, 1
        %s145 = smul.addr %s144, 8
        %s146 = scalar_lea.vmem [#allocation4], %s145
        %p147 = pneg %p60
        %p148 = pneg %p57
        %p149 = pneg %p88
        %p150 = pneg %p85
        %s151 = sand.u32 %s75, 1
        %s152 = scalar_lea.sflag [#allocation6], %s151
        %s153 = sand.u32 %s75, 1
        %s154 = smul.addr %s153, 8
        %s155 = scalar_lea.vmem [#allocation7], %s154
        %s156 = sld [smem:[#allocation3 + %s29]]
        %v157 = vld [vmem:[%s137] sm:$0xff]
        %v158 = vstv %s156
        %v159 = vmul.f32 %v157, %v158
        %160 = vst [vmem:[%s155] sm:$0xff] %v159
        %s161 = sand.u32 %s75, 1
        %s162 = scalar_lea.sflag [#allocation6], %s161
        %s163 = sand.u32 %s75, 1
        %s164 = smul.addr %s163, 8
        %s165 = scalar_lea.vmem [#allocation7], %s164
        // Predicated region
        $region29: #{tpu_custom_call.1} parent=23 // pred_check
          %p166 = pneg %p85
        $region30: #{tpu_custom_call.1} parent=23 // pred_check_branch
          %168 = sbr.rel (%p166) target = $region32
        $region31: #{tpu_custom_call.1} parent=23 // pred_region
          %s170 = ssub.s32 128, 128
          %171 = vsyncadd %s162, %s170
          %s172 = sadd.s32 %s30, %s29
          %s173 = smul.addr %s172, 128
          %s174 = scalar_lea.hbm %s2, %s173
          %s176 = sshll.u32 %s165, 4
          %s177 = int_to_ptr.vmem [resolvable:$true] %s176
          %179 = dma.vmem_to_hbm [thread:$0]  %s177, 128, %s174, %s162
        $region32: #{tpu_custom_call.1} parent=23 // pred_fallthru
          _
      $region24: #{tpu_custom_call.1} parent=5 // pred_fallthru
        _
      %p180 = scmp.le.s32.totalorder 2, %s20
      // Predicated region
      $region33: #{tpu_custom_call.1} parent=5 // pred_check
        %p181 = pneg %p180
      $region34: #{tpu_custom_call.1} parent=5 // pred_check_branch
        %183 = sbr.rel (%p181) target = $region36
      $region35: #{tpu_custom_call.1} parent=5 // pred_region
        %s184 = ssub.s32 %s20, 2
        // Predicated region
        $region37: #{tpu_custom_call.1} parent=35 // pred_check
          %p185 = pneg %p91
        $region38: #{tpu_custom_call.1} parent=35 // pred_check_branch
          %187 = sbr.rel (%p185) target = $region40
        $region39: #{tpu_custom_call.1} parent=35 // pred_region
          %s188 = sand.u32 %s76, 1
          %s189 = scalar_lea.sflag [#allocation6], %s188
          %s190 = sand.u32 %s76, 1
          %s191 = smul.addr %s190, 8
          %s192 = scalar_lea.vmem [#allocation7], %s191
          %193 = dma.done %s189, 128
        $region40: #{tpu_custom_call.1} parent=35 // pred_fallthru
          _
      $region36: #{tpu_custom_call.1} parent=5 // pred_fallthru
        _
    $region6: #{tpu_custom_call.1} parent=1 // loop_footer
      %s24 = sadd.s32 1, %s20
    $region7: #{tpu_custom_call.1} parent=1 // loop_footer_branch
      %19 = sbr.rel target = $region3
    $region8: #{tpu_custom_call.1} parent=1 // loop_exit
      _
    %194 = vsyncpa [#allocation5], 1
    %s195 = scalar_lea.sflag [#allocation5], 1
    %196 = vsyncpa %s195, 1
    %197 = vsyncpa [#allocation6], 1
    %s198 = scalar_lea.sflag [#allocation6], 1
    %199 = vsyncpa %s198, 1

</llo_original>
